<compile_context>
chip_gen: v5e
topology: v5e:2x2
jax: 0.10.0
libtpu: 0.0.40
codegen_flags: <defaults>
</compile_context>

<pallas_src>
import functools

import jax
import jax.numpy as jnp
from jax.experimental import pallas as pl
from jax.experimental.pallas import tpu as pltpu


# ---------------------------------------------------------------------------
# Hardware-aware tiling helpers
# ---------------------------------------------------------------------------
def _vmem_capacity_bytes():
    try:
        return int(pltpu.get_tpu_info().vmem_capacity_bytes)
    except Exception:
        return 64 * 1024 * 1024  # conservative default (v7x per-TC VMEM)


_VMEM_CAP = _vmem_capacity_bytes()
_BIG_VMEM = _VMEM_CAP >= 96 * 1024 * 1024          # v5e/v6e: 128 MiB, v7x: 64 MiB
_ROW_TILE_TARGET = 2048 if _BIG_VMEM else 1024     # row tiles for row-wise kernels
_MM_TM = 512 if _BIG_VMEM else 256                 # matmul tile targets
_MM_TN = 512
_MM_TK = 512


def _tile(dim, target, align):
    """Largest block that evenly divides `dim`: either `dim` itself (if it is
    <= target) or a multiple of `align` <= target; falls back to the full dim."""
    if dim <= target:
        return dim
    t = (target // align) * align
    while t >= align:
        if dim % t == 0:
            return t
        t -= align
    return dim


def _row_tile(n_rows, bytes_per_row):
    """Row tile for row-streaming kernels, bounded so double-buffered blocks
    stay well inside scoped VMEM on every TPU generation."""
    budget = _VMEM_CAP // 4
    max_rows = max(8, (budget // max(bytes_per_row, 1)) // 8 * 8)
    return _tile(n_rows, min(_ROW_TILE_TARGET, max_rows), 8)


def _compiler_params(sems, block_bytes):
    """dimension_semantics + vmem limit sized to ~4x the live blocks
    (double-buffered in + out), clamped to a budget safe on v5e/v6e/v7x."""
    limit = int(min(max(4 * block_bytes, 32 * 1024 * 1024), 48 * 1024 * 1024))
    return pltpu.CompilerParams(dimension_semantics=sems, vmem_limit_bytes=limit)


# ---------------------------------------------------------------------------
# Tiled matmul with fused bias + activation  (GraphConvolution / residual proj)
# ---------------------------------------------------------------------------
def _matmul_kernel(a_ref, b_ref, bias_ref, o_ref, acc_ref, *, add_bias, act):
    @pl.when(pl.program_id(2) == 0)
    def _init():
        acc_ref[...] = jnp.zeros_like(acc_ref)

    acc_ref[...] += jnp.dot(a_ref[...], b_ref[...],
                            preferred_element_type=jnp.float32)

    @pl.when(pl.program_id(2) == pl.num_programs(2) - 1)
    def _finalize():
        out = acc_ref[...]
        if add_bias:
            out = out + bias_ref[...].astype(jnp.float32)
        if act == "tanh":
            out = jnp.tanh(out)
        o_ref[...] = out.astype(o_ref.dtype)


def matmul_bias_act(a, b, bias=None, *, act=None):
    """out = act(a @ b + bias) as a tiled, double-buffered Pallas matmul."""
    M, K = a.shape
    K2, N = b.shape
    assert K == K2, (a.shape, b.shape)
    tm = _tile(M, _MM_TM, 8)
    tn = _tile(N, _MM_TN, 128)
    tk = _tile(K, _MM_TK, 128)
    add_bias = bias is not None
    bias2 = (bias if add_bias else jnp.zeros((N,), a.dtype)).reshape(1, N).astype(a.dtype)

    grid = (M // tm, N // tn, K // tk)
    block_bytes = 4 * (tm * tk + tk * tn + tn + 2 * tm * tn)
    kernel = functools.partial(_matmul_kernel, add_bias=add_bias, act=act)
    return pl.pallas_call(
        kernel,
        out_shape=jax.ShapeDtypeStruct((M, N), a.dtype),
        grid_spec=pltpu.PrefetchScalarGridSpec(
            num_scalar_prefetch=0,
            grid=grid,
            in_specs=[
                pl.BlockSpec((tm, tk), lambda i, j, k: (i, k)),
                pl.BlockSpec((tk, tn), lambda i, j, k: (k, j)),
                pl.BlockSpec((1, tn), lambda i, j, k: (0, j)),
            ],
            out_specs=pl.BlockSpec((tm, tn), lambda i, j, k: (i, j)),
            scratch_shapes=[pltpu.VMEM((tm, tn), jnp.float32)],
        ),
        compiler_params=_compiler_params(("parallel", "parallel", "arbitrary"),
                                         block_bytes),
    )(a, b, bias2)


# ---------------------------------------------------------------------------
# Layer attention (alpha-weighted sum over layers) + residual add, fused
# ---------------------------------------------------------------------------
def _combine_kernel(alpha_ref, feats_ref, res_ref, o_ref, *, n_layers, add_res):
    acc = alpha_ref[0] * feats_ref[0].astype(jnp.float32)
    for li in range(1, n_layers):
        acc = acc + alpha_ref[li] * feats_ref[li].astype(jnp.float32)
    if add_res:
        acc = acc + res_ref[...].astype(jnp.float32)
    o_ref[...] = acc.astype(o_ref.dtype)


def layer_combine(feats, alpha, residual=None):
    """result = sum_l alpha[l] * feats[l] (+ residual), row-tiled."""
    L, N, D = feats.shape
    add_res = residual is not None
    if residual is None:
        residual = jnp.zeros((N, D), feats.dtype)
    bytes_per_row = 4 * D * (L + 2)          # L feature rows + residual + output
    tn = _row_tile(N, bytes_per_row)
    block_bytes = bytes_per_row * tn + 4 * L
    kernel = functools.partial(_combine_kernel, n_layers=L, add_res=add_res)
    return pl.pallas_call(
        kernel,
        out_shape=jax.ShapeDtypeStruct((N, D), feats.dtype),
        grid_spec=pltpu.PrefetchScalarGridSpec(
            num_scalar_prefetch=0,
            grid=(N // tn,),
            in_specs=[
                pl.BlockSpec(memory_space=pltpu.MemorySpace.SMEM),   # alpha (L,)
                pl.BlockSpec((L, tn, D), lambda i: (0, i, 0)),
                pl.BlockSpec((tn, D), lambda i: (i, 0)),
            ],
            out_specs=pl.BlockSpec((tn, D), lambda i: (i, 0)),
        ),
        compiler_params=_compiler_params(("parallel",), block_bytes),
    )(alpha.reshape(L).astype(jnp.float32), feats, residual)


# ---------------------------------------------------------------------------
# Normal (torch: gamma * (x - mean) / (std + eps) + bias, unbiased std)
# ---------------------------------------------------------------------------
def _normal_last_kernel(x_ref, gamma_ref, bias_ref, o_ref, *, eps):
    """mode='l': per-row statistics over the feature (lane) dim."""
    x = x_ref[...].astype(jnp.float32)
    d = x.shape[-1]
    mean = jnp.mean(x, axis=-1, keepdims=True)
    c = x - mean
    var = jnp.sum(c * c, axis=-1, keepdims=True) / (d - 1)   # Bessel, like torch.std
    denom = jnp.sqrt(var) + eps                              # eps on std (torch parity)
    inv = pl.reciprocal(denom, approx=True)                  # EUP estimate, frees VALU
    inv = inv * (2.0 - denom * inv)                          # one Newton step -> ~fp32
    o_ref[...] = (gamma_ref[...].astype(jnp.float32) * (c * inv)
                  + bias_ref[...].astype(jnp.float32)).astype(o_ref.dtype)


def _normal_batch_kernel(x_ref, gamma_ref, bias_ref, o_ref, *, eps):
    """mode='b': per-column statistics over dim 0 (node axis resident in block)."""
    x = x_ref[...].astype(jnp.float32)
    n = x.shape[0]
    mean = jnp.mean(x, axis=0, keepdims=True)
    c = x - mean
    var = jnp.sum(c * c, axis=0, keepdims=True) / (n - 1)
    denom = jnp.sqrt(var) + eps
    inv = pl.reciprocal(denom, approx=True)
    inv = inv * (2.0 - denom * inv)
    o_ref[...] = (gamma_ref[...].astype(jnp.float32) * (c * inv)
                  + bias_ref[...].astype(jnp.float32)).astype(o_ref.dtype)


def normal_forward(x, gamma, bias, *, eps=1e-10, mode="l"):
    """Pallas Normal.forward for 2-D x; gamma/bias broadcast to x's shape."""
    N, D = x.shape
    gamma2 = jnp.broadcast_to(gamma, (N, D)).astype(x.dtype)
    bias2 = jnp.broadcast_to(bias, (N, D)).astype(x.dtype)

    if mode == "l":
        tn = _row_tile(N, 4 * D * 4)                 # x, gamma, bias, out per row
        grid = (N // tn,)
        blk = pl.BlockSpec((tn, D), lambda i: (i, 0))
        kernel = functools.partial(_normal_last_kernel, eps=eps)
        block_bytes = 4 * tn * D * 4
    else:
        # Node axis resident; grid tiles the feature axis in 128-aligned blocks.
        # TODO(synk): for node counts where an (N, tile_D) block no longer fits
        # VMEM, switch to a two-pass sum / sum-of-squares accumulator grid.
        td = _tile(D, 512, 128)
        grid = (D // td,)
        blk = pl.BlockSpec((N, td), lambda j: (0, j))
        kernel = functools.partial(_normal_batch_kernel, eps=eps)
        block_bytes = 4 * N * td * 4

    return pl.pallas_call(
        kernel,
        out_shape=jax.ShapeDtypeStruct((N, D), x.dtype),
        grid_spec=pltpu.PrefetchScalarGridSpec(
            num_scalar_prefetch=0,
            grid=grid,
            in_specs=[blk, blk, blk],
            out_specs=blk,
        ),
        compiler_params=_compiler_params(("parallel",), block_bytes),
    )(x, gamma2, bias2)


# ---------------------------------------------------------------------------
# Full GCN forward (eval mode: dropout = identity, activation = tanh)
# ---------------------------------------------------------------------------
def gcn_forward(params, g, x, *, layer_att=True, res=True, use_bias=True,
                norm="l", eps=1e-10):
    o_x = x
    feats = []
    h = x
    for w, b in params["layers"]:
        support = matmul_bias_act(h, w)                              # drop(x) @ W
        h = matmul_bias_act(g, support, bias=b if use_bias else None,
                            act="tanh")                              # tanh(A @ support + b)
        feats.append(h)
    stacked = jnp.stack(feats, axis=0)

    L = len(feats)
    if layer_att:
        alpha = params["alpha"].reshape(L)
    else:
        alpha = jnp.zeros((L,), x.dtype).at[-1].set(1.0)             # picks features[-1]

    residual = None
    if res:
        rw = params.get("res_weight")
        residual = matmul_bias_act(o_x, rw) if rw is not None else o_x

    combined = layer_combine(stacked, alpha, residual)
    return normal_forward(combined, params["gamma"], params["norm_bias"],
                          eps=eps, mode=norm)


# ---------------------------------------------------------------------------
# Pure-JAX references
# ---------------------------------------------------------------------------
def _normal_reference(x, gamma, bias, eps=1e-10, mode="l"):
    axis = -1 if mode == "l" else 0
    mean = jnp.mean(x, axis=axis, keepdims=True)
    std = jnp.std(x, axis=axis, keepdims=True, ddof=1)
    return gamma * (x - mean) / (std + eps) + bias


def _gcn_reference(params, g, x, *, layer_att=True, res=True, use_bias=True,
                   norm="l", eps=1e-10):
    o_x = x
    feats = []
    h = x
    for w, b in params["layers"]:
        out = g @ (h @ w)
        if use_bias:
            out = out + b
        h = jnp.tanh(out)
        feats.append(h)
    if layer_att:
        result = jnp.sum(params["alpha"].reshape(-1, 1, 1) * jnp.stack(feats, 0), 0)
    else:
        result = feats[-1]
    if res:
        rw = params.get("res_weight")
        if rw is not None:
            o_x = o_x @ rw
        result = o_x + result
    return _normal_reference(result, params["gamma"], params["norm_bias"],
                             eps=eps, mode=norm)


if __name__ == "__main__":
    node_num, input_dim, output_dim, layer_num = 64, 32, 128, 2

    key = jax.random.PRNGKey(0)
    k_adj, k_x, k_w0, k_w1, k_res, k_norm = jax.random.split(key, 6)

    def xavier_normal(k, shape):
        fan_in, fan_out = shape
        std = (2.0 / (fan_in + fan_out)) ** 0.5
        return (std * jax.random.normal(k, shape)).astype(jnp.float32)

    adj = jax.random.uniform(k_adj, (node_num, node_num), dtype=jnp.float32)
    adj = adj / jnp.sum(adj, axis=-1, keepdims=True)      # row-normalized adjacency
    x = jax.random.normal(k_x, (node_num, input_dim), dtype=jnp.float32)

    params = {
        "layers": [
            (xavier_normal(k_w0, (input_dim, output_dim)),
             jnp.zeros((output_dim,), jnp.float32)),
            (xavier_normal(k_w1, (output_dim, output_dim)),
             jnp.zeros((output_dim,), jnp.float32)),
        ],
        "alpha": jnp.full((layer_num, 1, 1), 1.0 / layer_num, jnp.float32),
        "res_weight": xavier_normal(k_res, (input_dim, output_dim)),  # input != output dim
        "gamma": jnp.ones((node_num, output_dim), jnp.float32),
        "norm_bias": jnp.zeros((node_num, output_dim), jnp.float32),
    }

    ok = True

    # (1) Standalone check of the Normal kernel (both modes), tight tolerance.
    xn = jax.random.normal(k_norm, (node_num, output_dim), dtype=jnp.float32)
    for mode in ("l", "b"):
        got = jax.block_until_ready(
            normal_forward(xn, params["gamma"], params["norm_bias"], mode=mode))
        want = _normal_reference(xn, params["gamma"], params["norm_bias"], mode=mode)
        if not jnp.allclose(got, want, atol=1e-4, rtol=1e-4):
            ok = False
            print("normal mismatch", mode, float(jnp.max(jnp.abs(got - want))))

    # (2) Full GCN forward vs. pure-JAX reference.  Tolerance leaves room for
    #     the MXU multi-pass f32 matmul path differing from XLA's default dot
    #     precision; the normalization itself is verified tightly above.
    out = jax.block_until_ready(gcn_forward(params, adj, x, norm="l"))
    ref = _gcn_reference(params, adj, x, norm="l")
    if out.shape != (node_num, output_dim) or not bool(jnp.all(jnp.isfinite(out))):
        ok = False
        print("bad output shape / non-finite values")
    if not jnp.allclose(out, ref, atol=2e-2, rtol=2e-2):
        ok = False
        print("gcn mismatch", float(jnp.max(jnp.abs(out - ref))))

    if ok:
        print("KERNEL_OK")
</pallas_src>

<mosaic_0001>
module attributes {stable_mosaic.version = 11 : i64} {
  func.func @_normal_last_kernel(%arg0: i32, %arg1: memref<64x128xf32, #tpu.memory_space<vmem>>, %arg2: memref<64x128xf32, #tpu.memory_space<vmem>>, %arg3: memref<64x128xf32, #tpu.memory_space<vmem>>, %arg4: memref<64x128xf32, #tpu.memory_space<vmem>>) attributes {dimension_semantics = [#tpu.dimension_semantics<parallel>], iteration_bounds = array<i64: 1>, scalar_prefetch = 0 : i64, scratch_operands = 0 : i64, tpu.core_type = #tpu.core_type<tc>, window_params = [{transform_indices = @transform_0, window_bounds = array<i64: 64, 128>}, {transform_indices = @transform_1, window_bounds = array<i64: 64, 128>}, {transform_indices = @transform_2, window_bounds = array<i64: 64, 128>}, {transform_indices = @transform_3, window_bounds = array<i64: 64, 128>}]} {
    %c0 = arith.constant 0 : index
    %c0_0 = arith.constant 0 : index
    %0 = vector.load %arg1[%c0, %c0_0] : memref<64x128xf32, #tpu.memory_space<vmem>>, vector<64x128xf32>
    %cst = arith.constant dense<0.000000e+00> : vector<64xf32>
    %1 = vector.multi_reduction <add>, %0, %cst [1] : vector<64x128xf32> to vector<64xf32>
    %2 = vector.shape_cast %1 : vector<64xf32> to vector<64x1xf32>
    %cst_1 = arith.constant 1.280000e+02 : f32
    %3 = vector.broadcast %cst_1 : f32 to vector<64x1xf32>
    %4 = arith.divf %2, %3 : vector<64x1xf32>
    %5 = vector.broadcast %4 : vector<64x1xf32> to vector<64x128xf32>
    %6 = arith.subf %0, %5 : vector<64x128xf32>
    %7 = arith.mulf %6, %6 : vector<64x128xf32>
    %cst_2 = arith.constant dense<0.000000e+00> : vector<64xf32>
    %8 = vector.multi_reduction <add>, %7, %cst_2 [1] : vector<64x128xf32> to vector<64xf32>
    %9 = vector.shape_cast %8 : vector<64xf32> to vector<64x1xf32>
    %cst_3 = arith.constant 1.270000e+02 : f32
    %10 = vector.broadcast %cst_3 : f32 to vector<64x1xf32>
    %11 = arith.divf %9, %10 : vector<64x1xf32>
    %12 = math.sqrt %11 : vector<64x1xf32>
    %cst_4 = arith.constant 1.000000e-10 : f32
    %13 = vector.broadcast %cst_4 : f32 to vector<64x1xf32>
    %14 = arith.addf %12, %13 : vector<64x1xf32>
    %15 = tpu.reciprocal %14 {approx = true} : vector<64x1xf32> -> vector<64x1xf32>
    %16 = arith.mulf %14, %15 : vector<64x1xf32>
    %cst_5 = arith.constant 2.000000e+00 : f32
    %17 = vector.broadcast %cst_5 : f32 to vector<64x1xf32>
    %18 = arith.subf %17, %16 : vector<64x1xf32>
    %19 = arith.mulf %15, %18 : vector<64x1xf32>
    %c0_6 = arith.constant 0 : index
    %c0_7 = arith.constant 0 : index
    %20 = vector.load %arg2[%c0_6, %c0_7] : memref<64x128xf32, #tpu.memory_space<vmem>>, vector<64x128xf32>
    %21 = vector.broadcast %19 : vector<64x1xf32> to vector<64x128xf32>
    %22 = arith.mulf %6, %21 : vector<64x128xf32>
    %23 = arith.mulf %20, %22 : vector<64x128xf32>
    %c0_8 = arith.constant 0 : index
    %c0_9 = arith.constant 0 : index
    %24 = vector.load %arg3[%c0_8, %c0_9] : memref<64x128xf32, #tpu.memory_space<vmem>>, vector<64x128xf32>
    %25 = arith.addf %23, %24 : vector<64x128xf32>
    %c0_10 = arith.constant 0 : index
    %c0_11 = arith.constant 0 : index
    %26 = vector.load %arg4[%c0_10, %c0_11] : memref<64x128xf32, #tpu.memory_space<vmem>>, vector<64x128xf32>
    tpu.vector_store %arg4[%c0_10, %c0_11], %25 {strides = array<i32>} : memref<64x128xf32, #tpu.memory_space<vmem>>, vector<64x128xf32>,
    return
  }
  func.func @transform_0(%arg0: i32) -> (i32, i32) {
    %c0_i32 = arith.constant 0 : i32
    %c0_i32_0 = arith.constant 0 : i32
    return %arg0, %c0_i32 : i32, i32
  }
  func.func @transform_1(%arg0: i32) -> (i32, i32) {
    %c0_i32 = arith.constant 0 : i32
    %c0_i32_0 = arith.constant 0 : i32
    return %arg0, %c0_i32 : i32, i32
  }
  func.func @transform_2(%arg0: i32) -> (i32, i32) {
    %c0_i32 = arith.constant 0 : i32
    %c0_i32_0 = arith.constant 0 : i32
    return %arg0, %c0_i32 : i32, i32
  }
  func.func @transform_3(%arg0: i32) -> (i32, i32) {
    %c0_i32 = arith.constant 0 : i32
    %c0_i32_0 = arith.constant 0 : i32
    return %arg0, %c0_i32 : i32, i32
  }
}

</mosaic_0001>

<llo_original>
// kernel: tpu_custom_call.1
$region0: #{tpu_custom_call.1}
  #allocation0 [shape = 'u32[]', space=smem, size = 0x4, offset = 0x4, fixed_abs, tag = 'smem constant byte address 0x4 - core index']
  #allocation1 [shape = 'u32[72,128]{1,0:T(1,128)}', space=vmem, size = 0x9000, scoped, tag = 'internal scratch']
  %s0 = inlined_call_operand.hbm [shape: f32[64,128], index: 0, kind: input, shape index: {}]
  %s1 = inlined_call_operand.hbm [shape: f32[64,128], index: 1, kind: input, shape index: {}]
  %s2 = inlined_call_operand.hbm [shape: f32[64,128], index: 2, kind: input, shape index: {}]
  %s3 = inlined_call_operand.hbm [shape: f32[64,128], index: 3, kind: output, shape index: {}]
  %s4 = sld [smem:[#allocation0]]
  $region34: #{tpu_custom_call.1} parent=0
    _
  %s6 = ssub.s32 1, %s4
  %s7 = scalar_select 0, %s6, %s4
  $region1: #{tpu_custom_call.1} parent=0
    #allocation2 [shape = 'u8[32768]{0}', space=vmem, size = 0x8000, scoped, tag = 'input window, operand 0, single buffered']
    #allocation3 [shape = 's32[1]{0}', space=sflag, size = 0x4, scoped, tag = 'scoped memory for tpu_custom_call.1']
    #allocation4 [shape = 's32[1]{0}', space=sflag, size = 0x4, scoped, tag = 'scoped memory for tpu_custom_call.1']
    #allocation5 [shape = 'u8[32768]{0}', space=vmem, size = 0x8000, scoped, tag = 'input window, operand 1, single buffered']
    #allocation6 [shape = 's32[1]{0}', space=sflag, size = 0x4, scoped, tag = 'scoped memory for tpu_custom_call.1']
    #allocation7 [shape = 'u8[32768]{0}', space=vmem, size = 0x8000, scoped, tag = 'input window, operand 2, single buffered']
    #allocation8 [shape = 'u8[32768]{0}', space=vmem, size = 0x8000, scoped, tag = 'output window, operand 0, single buffered']
    %8 = vsyncpa [#allocation3], 0
    %9 = vsyncpa [#allocation6], 0
    %10 = vsyncpa [#allocation4], 0
    // Predicated region
    $region2: #{tpu_custom_call.1} parent=1 // pred_check
      _
    $region3: #{tpu_custom_call.1} parent=1 // pred_check_branch
      %12 = sbr.rel (0) target = $region5
    $region4: #{tpu_custom_call.1} parent=1 // pred_region
      %14 = vsyncadd [#allocation3], 0
      %s15 = sshll.u32 %s0, 4
      %s16 = int_to_ptr.hbm [resolvable:$true] %s15
      %s17 = sshll.u32 [#allocation2], 4
      %s18 = int_to_ptr.vmem [resolvable:$true] %s17
      %23 = dma.hbm_to_vmem [thread:$0]  %s16, 1024, %s18, [#allocation3], 128, 128, 8
    $region5: #{tpu_custom_call.1} parent=1 // pred_fallthru
      _
    // Predicated region
    $region6: #{tpu_custom_call.1} parent=1 // pred_check
      _
    $region7: #{tpu_custom_call.1} parent=1 // pred_check_branch
      %25 = sbr.rel (0) target = $region9
    $region8: #{tpu_custom_call.1} parent=1 // pred_region
      %27 = vsyncadd [#allocation6], 0
      %s28 = sshll.u32 %s1, 4
      %s29 = int_to_ptr.hbm [resolvable:$true] %s28
      %s30 = sshll.u32 [#allocation5], 4
      %s31 = int_to_ptr.vmem [resolvable:$true] %s30
      %36 = dma.hbm_to_vmem [thread:$0]  %s29, 1024, %s31, [#allocation6], 128, 128, 8
    $region9: #{tpu_custom_call.1} parent=1 // pred_fallthru
      _
    // Predicated region
    $region10: #{tpu_custom_call.1} parent=1 // pred_check
      _
    $region11: #{tpu_custom_call.1} parent=1 // pred_check_branch
      %38 = sbr.rel (0) target = $region13
    $region12: #{tpu_custom_call.1} parent=1 // pred_region
      %40 = vsyncadd [#allocation6], 0
      %s41 = sshll.u32 %s2, 4
      %s42 = int_to_ptr.hbm [resolvable:$true] %s41
      %s43 = sshll.u32 [#allocation7], 4
      %s44 = int_to_ptr.vmem [resolvable:$true] %s43
      %49 = dma.hbm_to_vmem [thread:$0]  %s42, 1024, %s44, [#allocation6], 128, 128, 8
    $region13: #{tpu_custom_call.1} parent=1 // pred_fallthru
      _
    // Predicated region
    $region14: #{tpu_custom_call.1} parent=1 // pred_check
      _
    $region15: #{tpu_custom_call.1} parent=1 // pred_check_branch
      %51 = sbr.rel (0) target = $region17
    $region16: #{tpu_custom_call.1} parent=1 // pred_region
      %53 = dma.done [#allocation3], 1024
    $region17: #{tpu_custom_call.1} parent=1 // pred_fallthru
      _
    // Predicated region
    $region18: #{tpu_custom_call.1} parent=1 // pred_check
      _
    $region19: #{tpu_custom_call.1} parent=1 // pred_check_branch
      %55 = sbr.rel (0) target = $region21
    $region20: #{tpu_custom_call.1} parent=1 // pred_region
      %57 = dma.done [#allocation6], 1024
    $region21: #{tpu_custom_call.1} parent=1 // pred_fallthru
      _
    // Predicated region
    $region22: #{tpu_custom_call.1} parent=1 // pred_check
      _
    $region23: #{tpu_custom_call.1} parent=1 // pred_check_branch
      %59 = sbr.rel (0) target = $region25
    $region24: #{tpu_custom_call.1} parent=1 // pred_region
      %61 = dma.done [#allocation6], 1024
    $region25: #{tpu_custom_call.1} parent=1 // pred_fallthru
      _
    %v62 = vld [vmem:[#allocation2] sm:$0xff]
    %v63 = vld [vmem:[#allocation2 + $0x8] sm:$0xff]
    %v64 = vld [vmem:[#allocation2 + $0x10] sm:$0xff]
    %v65 = vld [vmem:[#allocation2 + $0x18] sm:$0xff]
    %v66 = vld [vmem:[#allocation2 + $0x20] sm:$0xff]
    %v67 = vld [vmem:[#allocation2 + $0x28] sm:$0xff]
    %v68 = vld [vmem:[#allocation2 + $0x30] sm:$0xff]
    %v69 = vld [vmem:[#allocation2 + $0x38] sm:$0xff]
    %70 = vadd.xlane.f32.xlu0 %v62
    %v71 = vpop.xlane.xlu0 %70
    %72 = vadd.xlane.f32.xlu0 %v63
    %v73 = vpop.xlane.xlu0 %72
    %74 = vadd.xlane.f32.xlu0 %v64
    %v75 = vpop.xlane.xlu0 %74
    %76 = vadd.xlane.f32.xlu0 %v65
    %v77 = vpop.xlane.xlu0 %76
    %78 = vadd.xlane.f32.xlu0 %v66
    %v79 = vpop.xlane.xlu0 %78
    %80 = vadd.xlane.f32.xlu0 %v67
    %v81 = vpop.xlane.xlu0 %80
    %82 = vadd.xlane.f32.xlu0 %v68
    %v83 = vpop.xlane.xlu0 %82
    %84 = vadd.xlane.f32.xlu0 %v69
    %v85 = vpop.xlane.xlu0 %84
    %v86 = vrcp.pop 128.0
    %v87 = vmul.f32 128.0, %v86
    %v88 = vsub.f32 1.0, %v87
    %v89 = vmul.f32 %v86, %v88
    %v90 = vadd.f32 %v86, %v89
    %vm91 = vweird.f32 %v86
    %v92 = vsel %vm91, %v86, %v90
    %v93 = vmul.f32 %v71, %v92
    %v94 = vmul.f32 %v73, %v92
    %v95 = vmul.f32 %v75, %v92
    %v96 = vmul.f32 %v77, %v92
    %v97 = vmul.f32 %v79, %v92
    %v98 = vmul.f32 %v81, %v92
    %v99 = vmul.f32 %v83, %v92
    %v100 = vmul.f32 %v85, %v92
    %v101 = vsub.f32 %v62, %v93
    %v102 = vsub.f32 %v63, %v94
    %v103 = vsub.f32 %v64, %v95
    %v104 = vsub.f32 %v65, %v96
    %v105 = vsub.f32 %v66, %v97
    %v106 = vsub.f32 %v67, %v98
    %v107 = vsub.f32 %v68, %v99
    %v108 = vsub.f32 %v69, %v100
    %v109 = vmul.f32 %v101, %v101
    %v110 = vmul.f32 %v102, %v102
    %v111 = vmul.f32 %v103, %v103
    %v112 = vmul.f32 %v104, %v104
    %v113 = vmul.f32 %v105, %v105
    %v114 = vmul.f32 %v106, %v106
    %v115 = vmul.f32 %v107, %v107
    %v116 = vmul.f32 %v108, %v108
    %117 = vadd.xlane.f32.xlu0 %v109
    %v118 = vpop.xlane.xlu0 %117
    %119 = vadd.xlane.f32.xlu0 %v110
    %v120 = vpop.xlane.xlu0 %119
    %121 = vadd.xlane.f32.xlu0 %v111
    %v122 = vpop.xlane.xlu0 %121
    %123 = vadd.xlane.f32.xlu0 %v112
    %v124 = vpop.xlane.xlu0 %123
    %125 = vadd.xlane.f32.xlu0 %v113
    %v126 = vpop.xlane.xlu0 %125
    %127 = vadd.xlane.f32.xlu0 %v114
    %v128 = vpop.xlane.xlu0 %127
    %129 = vadd.xlane.f32.xlu0 %v115
    %v130 = vpop.xlane.xlu0 %129
    %131 = vadd.xlane.f32.xlu0 %v116
    %v132 = vpop.xlane.xlu0 %131
    %v133 = vrcp.pop 127.0
    %v134 = vmul.f32 127.0, %v133
    %v135 = vsub.f32 1.0, %v134
    %v136 = vmul.f32 %v133, %v135
    %v137 = vadd.f32 %v133, %v136
    %vm138 = vweird.f32 %v133
    %v139 = vsel %vm138, %v133, %v137
    %v140 = vmul.f32 %v118, %v139
    %v141 = vmul.f32 %v120, %v139
    %v142 = vmul.f32 %v122, %v139
    %v143 = vmul.f32 %v124, %v139
    %v144 = vmul.f32 %v126, %v139
    %v145 = vmul.f32 %v128, %v139
    %v146 = vmul.f32 %v130, %v139
    %v147 = vmul.f32 %v132, %v139
    %v148 = vrsqrt.pop %v140
    %v149 = vmul.f32 %v148, %v140
    %v150 = vmul.f32 %v149, %v148
    %v151 = vmul.f32 0.5, %v150
    %v152 = vsub.f32 1.5, %v151
    %v153 = vmul.f32 %v148, %v152
    %v154 = vmul.f32 %v140, %v153
    %vm155 = vcmp.eq.f32.partialorder %v140, inf
    %v156 = vsel %vm155, %v140, %v154
    %vm157 = vcmp.eq.f32.partialorder %v140, 0.0
    %v158 = vand.u32 %v140, 2147483648
    %v159 = vsel %vm157, %v158, %v156
    %v160 = vrsqrt.pop %v141
    %v161 = vmul.f32 %v160, %v141
    %v162 = vmul.f32 %v161, %v160
    %v163 = vmul.f32 0.5, %v162
    %v164 = vsub.f32 1.5, %v163
    %v165 = vmul.f32 %v160, %v164
    %v166 = vmul.f32 %v141, %v165
    %vm167 = vcmp.eq.f32.partialorder %v141, inf
    %v168 = vsel %vm167, %v141, %v166
    %vm169 = vcmp.eq.f32.partialorder %v141, 0.0
    %v170 = vand.u32 %v141, 2147483648
    %v171 = vsel %vm169, %v170, %v168
    %v172 = vrsqrt.pop %v142
    %v173 = vmul.f32 %v172, %v142
    %v174 = vmul.f32 %v173, %v172
    %v175 = vmul.f32 0.5, %v174
    %v176 = vsub.f32 1.5, %v175
    %v177 = vmul.f32 %v172, %v176
    %v178 = vmul.f32 %v142, %v177
    %vm179 = vcmp.eq.f32.partialorder %v142, inf
    %v180 = vsel %vm179, %v142, %v178
    %vm181 = vcmp.eq.f32.partialorder %v142, 0.0
    %v182 = vand.u32 %v142, 2147483648
    %v183 = vsel %vm181, %v182, %v180
    %v184 = vrsqrt.pop %v143
    %v185 = vmul.f32 %v184, %v143
    %v186 = vmul.f32 %v185, %v184
    %v187 = vmul.f32 0.5, %v186
    %v188 = vsub.f32 1.5, %v187
    %v189 = vmul.f32 %v184, %v188
    %v190 = vmul.f32 %v143, %v189
    %vm191 = vcmp.eq.f32.partialorder %v143, inf
    %v192 = vsel %vm191, %v143, %v190
    %vm193 = vcmp.eq.f32.partialorder %v143, 0.0
    %v194 = vand.u32 %v143, 2147483648
    %v195 = vsel %vm193, %v194, %v192
    %v196 = vrsqrt.pop %v144
    %v197 = vmul.f32 %v196, %v144
    %v198 = vmul.f32 %v197, %v196
    %v199 = vmul.f32 0.5, %v198
    %v200 = vsub.f32 1.5, %v199
    %v201 = vmul.f32 %v196, %v200
    %v202 = vmul.f32 %v144, %v201
    %vm203 = vcmp.eq.f32.partialorder %v144, inf
    %v204 = vsel %vm203, %v144, %v202
    %vm205 = vcmp.eq.f32.partialorder %v144, 0.0
    %v206 = vand.u32 %v144, 2147483648
    %v207 = vsel %vm205, %v206, %v204
    %v208 = vrsqrt.pop %v145
    %v209 = vmul.f32 %v208, %v145
    %v210 = vmul.f32 %v209, %v208
    %v211 = vmul.f32 0.5, %v210
    %v212 = vsub.f32 1.5, %v211
    %v213 = vmul.f32 %v208, %v212
    %v214 = vmul.f32 %v145, %v213
    %vm215 = vcmp.eq.f32.partialorder %v145, inf
    %v216 = vsel %vm215, %v145, %v214
    %vm217 = vcmp.eq.f32.partialorder %v145, 0.0
    %v218 = vand.u32 %v145, 2147483648
    %v219 = vsel %vm217, %v218, %v216
    %v220 = vrsqrt.pop %v146
    %v221 = vmul.f32 %v220, %v146
    %v222 = vmul.f32 %v221, %v220
    %v223 = vmul.f32 0.5, %v222
    %v224 = vsub.f32 1.5, %v223
    %v225 = vmul.f32 %v220, %v224
    %v226 = vmul.f32 %v146, %v225
    %vm227 = vcmp.eq.f32.partialorder %v146, inf
    %v228 = vsel %vm227, %v146, %v226
    %vm229 = vcmp.eq.f32.partialorder %v146, 0.0
    %v230 = vand.u32 %v146, 2147483648
    %v231 = vsel %vm229, %v230, %v228
    %v232 = vrsqrt.pop %v147
    %v233 = vmul.f32 %v232, %v147
    %v234 = vmul.f32 %v233, %v232
    %v235 = vmul.f32 0.5, %v234
    %v236 = vsub.f32 1.5, %v235
    %v237 = vmul.f32 %v232, %v236
    %v238 = vmul.f32 %v147, %v237
    %vm239 = vcmp.eq.f32.partialorder %v147, inf
    %v240 = vsel %vm239, %v147, %v238
    %vm241 = vcmp.eq.f32.partialorder %v147, 0.0
    %v242 = vand.u32 %v147, 2147483648
    %v243 = vsel %vm241, %v242, %v240
    %v244 = vadd.f32 %v159, 1e-10
    %v245 = vadd.f32 %v171, 1e-10
    %v246 = vadd.f32 %v183, 1e-10
    %v247 = vadd.f32 %v195, 1e-10
    %v248 = vadd.f32 %v207, 1e-10
    %v249 = vadd.f32 %v219, 1e-10
    %v250 = vadd.f32 %v231, 1e-10
    %v251 = vadd.f32 %v243, 1e-10
    %v252 = vrcp.pop %v244
    %v253 = vrcp.pop %v245
    %v254 = vrcp.pop %v246
    %v255 = vrcp.pop %v247
    %v256 = vrcp.pop %v248
    %v257 = vrcp.pop %v249
    %v258 = vrcp.pop %v250
    %v259 = vrcp.pop %v251
    %v260 = vmul.f32 %v244, %v252
    %v261 = vmul.f32 %v245, %v253
    %v262 = vmul.f32 %v246, %v254
    %v263 = vmul.f32 %v247, %v255
    %v264 = vmul.f32 %v248, %v256
    %v265 = vmul.f32 %v249, %v257
    %v266 = vmul.f32 %v250, %v258
    %v267 = vmul.f32 %v251, %v259
    %v268 = vsub.f32 2.0, %v260
    %v269 = vsub.f32 2.0, %v261
    %v270 = vsub.f32 2.0, %v262
    %v271 = vsub.f32 2.0, %v263
    %v272 = vsub.f32 2.0, %v264
    %v273 = vsub.f32 2.0, %v265
    %v274 = vsub.f32 2.0, %v266
    %v275 = vsub.f32 2.0, %v267
    %v276 = vmul.f32 %v252, %v268
    %v277 = vmul.f32 %v253, %v269
    %v278 = vmul.f32 %v254, %v270
    %v279 = vmul.f32 %v255, %v271
    %v280 = vmul.f32 %v256, %v272
    %v281 = vmul.f32 %v257, %v273
    %v282 = vmul.f32 %v258, %v274
    %v283 = vmul.f32 %v259, %v275
    %v284 = vld [vmem:[#allocation5] sm:$0xff]
    %v285 = vld [vmem:[#allocation5 + $0x8] sm:$0xff]
    %v286 = vld [vmem:[#allocation5 + $0x10] sm:$0xff]
    %v287 = vld [vmem:[#allocation5 + $0x18] sm:$0xff]
    %v288 = vld [vmem:[#allocation5 + $0x20] sm:$0xff]
    %v289 = vld [vmem:[#allocation5 + $0x28] sm:$0xff]
    %v290 = vld [vmem:[#allocation5 + $0x30] sm:$0xff]
    %v291 = vld [vmem:[#allocation5 + $0x38] sm:$0xff]
    %v292 = vmul.f32 %v101, %v276
    %v293 = vmul.f32 %v102, %v277
    %v294 = vmul.f32 %v103, %v278
    %v295 = vmul.f32 %v104, %v279
    %v296 = vmul.f32 %v105, %v280
    %v297 = vmul.f32 %v106, %v281
    %v298 = vmul.f32 %v107, %v282
    %v299 = vmul.f32 %v108, %v283
    %v300 = vmul.f32 %v284, %v292
    %v301 = vmul.f32 %v285, %v293
    %v302 = vmul.f32 %v286, %v294
    %v303 = vmul.f32 %v287, %v295
    %v304 = vmul.f32 %v288, %v296
    %v305 = vmul.f32 %v289, %v297
    %v306 = vmul.f32 %v290, %v298
    %v307 = vmul.f32 %v291, %v299
    %v308 = vld [vmem:[#allocation7] sm:$0xff]
    %v309 = vld [vmem:[#allocation7 + $0x8] sm:$0xff]
    %v310 = vld [vmem:[#allocation7 + $0x10] sm:$0xff]
    %v311 = vld [vmem:[#allocation7 + $0x18] sm:$0xff]
    %v312 = vld [vmem:[#allocation7 + $0x20] sm:$0xff]
    %v313 = vld [vmem:[#allocation7 + $0x28] sm:$0xff]
    %v314 = vld [vmem:[#allocation7 + $0x30] sm:$0xff]
    %v315 = vld [vmem:[#allocation7 + $0x38] sm:$0xff]
    %v316 = vadd.f32 %v300, %v308
    %v317 = vadd.f32 %v301, %v309
    %v318 = vadd.f32 %v302, %v310
    %v319 = vadd.f32 %v303, %v311
    %v320 = vadd.f32 %v304, %v312
    %v321 = vadd.f32 %v305, %v313
    %v322 = vadd.f32 %v306, %v314
    %v323 = vadd.f32 %v307, %v315
    %324 = vst [vmem:[#allocation8] sm:$0xff] %v316
    %325 = vst [vmem:[#allocation8 + $0x8] sm:$0xff] %v317
    %326 = vst [vmem:[#allocation8 + $0x10] sm:$0xff] %v318
    %327 = vst [vmem:[#allocation8 + $0x18] sm:$0xff] %v319
    %328 = vst [vmem:[#allocation8 + $0x20] sm:$0xff] %v320
    %329 = vst [vmem:[#allocation8 + $0x28] sm:$0xff] %v321
    %330 = vst [vmem:[#allocation8 + $0x30] sm:$0xff] %v322
    %331 = vst [vmem:[#allocation8 + $0x38] sm:$0xff] %v323
    // Predicated region
    $region26: #{tpu_custom_call.1} parent=1 // pred_check
      _
    $region27: #{tpu_custom_call.1} parent=1 // pred_check_branch
      %333 = sbr.rel (0) target = $region29
    $region28: #{tpu_custom_call.1} parent=1 // pred_region
      %335 = vsyncadd [#allocation4], 0
      %s336 = sshll.u32 [#allocation8], 4
      %s337 = int_to_ptr.vmem [resolvable:$true] %s336
      %s338 = sshll.u32 %s3, 4
      %s339 = int_to_ptr.hbm [resolvable:$true] %s338
      %344 = dma.vmem_to_hbm [thread:$0]  %s337, 1024, %s339, [#allocation4], 128, 128, 8
    $region29: #{tpu_custom_call.1} parent=1 // pred_fallthru
      _
    // Predicated region
    $region30: #{tpu_custom_call.1} parent=1 // pred_check
      _
    $region31: #{tpu_custom_call.1} parent=1 // pred_check_branch
      %346 = sbr.rel (0) target = $region33
    $region32: #{tpu_custom_call.1} parent=1 // pred_region
      %348 = dma.done [#allocation4], 1024
    $region33: #{tpu_custom_call.1} parent=1 // pred_fallthru
      _
    %349 = vsyncpa [#allocation3], 1
    %350 = vsyncpa [#allocation6], 1
    %351 = vsyncpa [#allocation4], 1

</llo_original>
